<compile_context>
chip_gen: v7x
topology: tpu7x:2x2x1
jax: 0.10.0
libtpu: 0.0.40
codegen_flags: <defaults>
</compile_context>

<pallas_src>
import functools

import jax
import jax.numpy as jnp
from jax import lax
from jax.experimental import pallas as pl
from jax.experimental.pallas import tpu as pltpu


def _round_up(n, m):
    return ((n + m - 1) // m) * m


def _mlp_kernel(x_ref, w1_ref, b1_ref, w2_ref, b2_ref, w3_ref, b3_ref, o_ref):
    # x_ref: (ncs, 6, chunk) bf16  -- batch on lanes, features on sublanes
    # o_ref: (ncs, 2, chunk) f32
    # Weights are in PyTorch layout (out_features, in_features) so
    #   y^T = W @ x^T + b   matches nn.Linear's  y = x @ W^T + b  exactly.
    ncs = x_ref.shape[0]
    chunk = x_ref.shape[2]

    w1 = w1_ref[...]                                      # (32, 6)  bf16
    w2 = w2_ref[...]                                      # (16, 32) bf16
    w3 = w3_ref[...]                                      # (2, 16)  bf16
    # Hoist bias broadcasts out of the slab loop (broadcast_in_dim is not CSE'd
    # inside loops).
    b1 = jnp.broadcast_to(b1_ref[...], (w1_ref.shape[0], chunk))   # (32, chunk) f32
    b2 = jnp.broadcast_to(b2_ref[...], (w2_ref.shape[0], chunk))   # (16, chunk) f32
    b3 = jnp.broadcast_to(b3_ref[...], (w3_ref.shape[0], chunk))   # (2, chunk)  f32

    def body(c, carry):
        xT = x_ref[c]                                     # (6, chunk) bf16

        # layer1: Linear(6, 32) + ReLU
        h1 = jnp.dot(w1, xT, preferred_element_type=jnp.float32)        # (32, chunk)
        h1 = jnp.maximum(h1 + b1, 0.0)

        # layer2: Linear(32, 16) + ReLU
        h2 = jnp.dot(w2, h1.astype(jnp.bfloat16),
                     preferred_element_type=jnp.float32)                # (16, chunk)
        h2 = jnp.maximum(h2 + b2, 0.0)

        # output: Linear(16, 2), no activation
        y = jnp.dot(w3, h2.astype(jnp.bfloat16),
                    preferred_element_type=jnp.float32)                 # (2, chunk)
        o_ref[c] = (y + b3).astype(o_ref.dtype)
        return carry

    lax.fori_loop(0, ncs, body, 0)


@functools.partial(jax.jit, static_argnames=("chunk", "max_chunks_per_step"))
def mlp_forward(x, w1, b1, w2, b2, w3, b3, *, chunk=8192, max_chunks_per_step=16):
    """x: (B, 6) f32.  Weights in PyTorch layout (out, in), biases (out,).
    Returns (B, 2) f32."""
    B = x.shape[0]

    # --- tile sizing -------------------------------------------------------
    chunk = _round_up(min(chunk, _round_up(B, 128)), 128)   # lanes per compute slab
    n = pl.cdiv(B, chunk)                                   # total slabs
    Bp = n * chunk
    # Slabs per grid step: as big as possible (amortize per-step overhead) while
    # keeping >= 2 grid steps when feasible so v7x's two TensorCores both work.
    ncs = max(1, min(max_chunks_per_step, pl.cdiv(n, 2)))
    ncs = min(ncs, n)
    grid = (pl.cdiv(n, ncs),)

    # --- layout plumbing at the boundary (no extra kernel compute) ---------
    # batch -> lanes, features -> sublanes; bf16 stream; biases as columns.
    x_bf = x.astype(jnp.bfloat16)
    x3 = jnp.pad(x_bf, ((0, Bp - B), (0, 0))).reshape(n, chunk, 6).transpose(0, 2, 1)
    w1b, w2b, w3b = (w.astype(jnp.bfloat16) for w in (w1, w2, w3))
    b1c, b2c, b3c = (b.astype(jnp.float32).reshape(-1, 1) for b in (b1, b2, b3))

    const = lambda a: pl.BlockSpec(a.shape, lambda i: (0,) * a.ndim)  # VMEM-resident
    cost = pl.CostEstimate(
        flops=2 * (6 * 32 + 32 * 16 + 16 * 2) * Bp,
        transcendentals=0,
        bytes_accessed=int(Bp * (6 * 2 + 2 * 4)          # bf16 in + f32 out
                           + 2 * (6 * 32 + 32 * 16 + 16 * 2) + 4 * 50),
    )

    out3 = pl.pallas_call(
        _mlp_kernel,
        out_shape=jax.ShapeDtypeStruct((n, 2, chunk), jnp.float32),
        grid=grid,
        in_specs=[
            pl.BlockSpec((ncs, 6, chunk), lambda i: (i, 0, 0)),   # streamed over batch
            const(w1b), const(b1c),
            const(w2b), const(b2c),
            const(w3b), const(b3c),
        ],
        out_specs=pl.BlockSpec((ncs, 2, chunk), lambda i: (i, 0, 0)),  # lane-dense out
        compiler_params=pltpu.CompilerParams(
            dimension_semantics=("parallel",),          # shards batch across v7x TCs
            vmem_limit_bytes=32 * 1024 * 1024,          # > v5e's 16 MiB default
        ),
        cost_estimate=cost,
    )(x3, w1b, b1c, w2b, b2c, w3b, b3c)

    return out3.transpose(0, 2, 1).reshape(Bp, 2)[:B]    # (B, 2) f32


def init_params(key):
    """Deterministic init mimicking torch.nn.Linear default
    (U[-1/sqrt(fan_in), +1/sqrt(fan_in)]).  Weights kept in PyTorch layout
    (out_features, in_features)."""
    dims = [(6, 32), (32, 16), (16, 2)]
    params = []
    for fan_in, fan_out in dims:
        key, kw, kb = jax.random.split(key, 3)
        bound = 1.0 / (fan_in ** 0.5)
        w = jax.random.uniform(kw, (fan_out, fan_in), jnp.float32, -bound, bound)
        b = jax.random.uniform(kb, (fan_out,), jnp.float32, -bound, bound)
        params.extend([w, b])
    return params


def reference_forward(x, w1, b1, w2, b2, w3, b3):
    """Pure-JAX f32 reference matching the PyTorch module."""
    h1 = jnp.maximum(x @ w1.T + b1, 0.0)
    h2 = jnp.maximum(h1 @ w2.T + b2, 0.0)
    return h2 @ w3.T + b3


if __name__ == "__main__":
    key = jax.random.PRNGKey(0)
    key, kx = jax.random.split(key)
    params = init_params(key)

    # Small-batch sanity (single grid step, single slab).
    B = 8
    x = jax.random.normal(kx, (B, 6), jnp.float32)
    out = jax.block_until_ready(mlp_forward(x, *params))
    ref = reference_forward(x, *params)
    assert out.shape == (B, 2), out.shape
    # bf16 stream + bf16-around-the-dot => loosened tolerance vs f32 reference.
    assert jnp.allclose(out, ref, atol=5e-2, rtol=5e-2), "mismatch vs reference (B=8)"

    # Multi-step + ragged case: 3 slabs of 128 lanes, 2 slabs per grid step ->
    # grid=(2,) with a ragged final block, and B not a multiple of the slab.
    B2 = 300
    x2 = jax.random.normal(jax.random.PRNGKey(1), (B2, 6), jnp.float32)
    out2 = jax.block_until_ready(
        mlp_forward(x2, *params, chunk=128, max_chunks_per_step=2))
    ref2 = reference_forward(x2, *params)
    assert out2.shape == (B2, 2), out2.shape
    assert jnp.allclose(out2, ref2, atol=5e-2, rtol=5e-2), "mismatch vs reference (B=300)"

    print("KERNEL_OK")
</pallas_src>

<mosaic_0001>
module attributes {stable_mosaic.version = 11 : i64} {
  func.func @_mlp_kernel(%arg0: i32, %arg1: memref<1x6x128xbf16, #tpu.memory_space<vmem>>, %arg2: memref<32x6xbf16, #tpu.memory_space<vmem>>, %arg3: memref<32x1xf32, #tpu.memory_space<vmem>>, %arg4: memref<16x32xbf16, #tpu.memory_space<vmem>>, %arg5: memref<16x1xf32, #tpu.memory_space<vmem>>, %arg6: memref<2x16xbf16, #tpu.memory_space<vmem>>, %arg7: memref<2x1xf32, #tpu.memory_space<vmem>>, %arg8: memref<1x2x128xf32, #tpu.memory_space<vmem>>) attributes {dimension_semantics = [#tpu.dimension_semantics<parallel>], iteration_bounds = array<i64: 1>, scalar_prefetch = 0 : i64, scratch_operands = 0 : i64, tpu.core_type = #tpu.core_type<tc>, window_params = [{transform_indices = @transform_0, window_bounds = array<i64: 1, 6, 128>}, {pipeline_mode = #tpu.pipeline_mode<synchronous>, transform_indices = @transform_1, window_bounds = array<i64: 32, 6>}, {pipeline_mode = #tpu.pipeline_mode<synchronous>, transform_indices = @transform_2, window_bounds = array<i64: 32, 1>}, {pipeline_mode = #tpu.pipeline_mode<synchronous>, transform_indices = @transform_3, window_bounds = array<i64: 16, 32>}, {pipeline_mode = #tpu.pipeline_mode<synchronous>, transform_indices = @transform_4, window_bounds = array<i64: 16, 1>}, {pipeline_mode = #tpu.pipeline_mode<synchronous>, transform_indices = @transform_5, window_bounds = array<i64: 2, 16>}, {pipeline_mode = #tpu.pipeline_mode<synchronous>, transform_indices = @transform_6, window_bounds = array<i64: 2, 1>}, {transform_indices = @transform_7, window_bounds = array<i64: 1, 2, 128>}]} {
    %c0 = arith.constant 0 : index
    %c0_0 = arith.constant 0 : index
    %0 = vector.load %arg2[%c0, %c0_0] : memref<32x6xbf16, #tpu.memory_space<vmem>>, vector<32x6xbf16>
    %c0_1 = arith.constant 0 : index
    %c0_2 = arith.constant 0 : index
    %1 = vector.load %arg4[%c0_1, %c0_2] : memref<16x32xbf16, #tpu.memory_space<vmem>>, vector<16x32xbf16>
    %c0_3 = arith.constant 0 : index
    %c0_4 = arith.constant 0 : index
    %2 = vector.load %arg6[%c0_3, %c0_4] : memref<2x16xbf16, #tpu.memory_space<vmem>>, vector<2x16xbf16>
    %c0_5 = arith.constant 0 : index
    %c0_6 = arith.constant 0 : index
    %3 = vector.load %arg3[%c0_5, %c0_6] : memref<32x1xf32, #tpu.memory_space<vmem>>, vector<32x1xf32>
    %4 = vector.shape_cast %3 : vector<32x1xf32> to vector<32x1xf32>
    %5 = vector.broadcast %4 : vector<32x1xf32> to vector<32x128xf32>
    %c0_7 = arith.constant 0 : index
    %c0_8 = arith.constant 0 : index
    %6 = vector.load %arg5[%c0_7, %c0_8] : memref<16x1xf32, #tpu.memory_space<vmem>>, vector<16x1xf32>
    %7 = vector.shape_cast %6 : vector<16x1xf32> to vector<16x1xf32>
    %8 = vector.broadcast %7 : vector<16x1xf32> to vector<16x128xf32>
    %c0_9 = arith.constant 0 : index
    %c0_10 = arith.constant 0 : index
    %9 = vector.load %arg7[%c0_9, %c0_10] : memref<2x1xf32, #tpu.memory_space<vmem>>, vector<2x1xf32>
    %10 = vector.shape_cast %9 : vector<2x1xf32> to vector<2x1xf32>
    %11 = vector.broadcast %10 : vector<2x1xf32> to vector<2x128xf32>
    %c0_i32 = arith.constant 0 : i32
    %12 = arith.index_cast %c0_i32 : i32 to index
    %c0_11 = arith.constant 0 : index
    %c0_12 = arith.constant 0 : index
    %13 = vector.load %arg1[%12, %c0_11, %c0_12] : memref<1x6x128xbf16, #tpu.memory_space<vmem>>, vector<1x6x128xbf16>
    %14 = vector.shape_cast %13 : vector<1x6x128xbf16> to vector<6x128xbf16>
    %cst = arith.constant dense<0.000000e+00> : vector<32x128xf32>
    %15 = tpu.matmul %0, %14, %cst {dimension_numbers = #tpu.dot_dimension_numbers<[1], [0], [0], [1], [0, 0, 1, 1], [], []>} : vector<32x6xbf16>, vector<6x128xbf16>, vector<32x128xf32> -> vector<32x128xf32>
    %16 = arith.addf %15, %5 : vector<32x128xf32>
    %cst_13 = arith.constant 0.000000e+00 : f32
    %17 = vector.broadcast %cst_13 : f32 to vector<32x128xf32>
    %18 = arith.maximumf %16, %17 : vector<32x128xf32>
    %19 = arith.truncf %18 : vector<32x128xf32> to vector<32x128xbf16>
    %cst_14 = arith.constant dense<0.000000e+00> : vector<16x128xf32>
    %20 = tpu.matmul %1, %19, %cst_14 {dimension_numbers = #tpu.dot_dimension_numbers<[1], [0], [0], [1], [0, 0, 1, 1], [], []>} : vector<16x32xbf16>, vector<32x128xbf16>, vector<16x128xf32> -> vector<16x128xf32>
    %21 = arith.addf %20, %8 : vector<16x128xf32>
    %cst_15 = arith.constant 0.000000e+00 : f32
    %22 = vector.broadcast %cst_15 : f32 to vector<16x128xf32>
    %23 = arith.maximumf %21, %22 : vector<16x128xf32>
    %24 = arith.truncf %23 : vector<16x128xf32> to vector<16x128xbf16>
    %cst_16 = arith.constant dense<0.000000e+00> : vector<2x128xf32>
    %25 = tpu.matmul %2, %24, %cst_16 {dimension_numbers = #tpu.dot_dimension_numbers<[1], [0], [0], [1], [0, 0, 1, 1], [], []>} : vector<2x16xbf16>, vector<16x128xbf16>, vector<2x128xf32> -> vector<2x128xf32>
    %26 = arith.addf %25, %11 : vector<2x128xf32>
    %27 = arith.index_cast %c0_i32 : i32 to index
    %c0_17 = arith.constant 0 : index
    %c0_18 = arith.constant 0 : index
    %28 = vector.load %arg8[%27, %c0_17, %c0_18] : memref<1x2x128xf32, #tpu.memory_space<vmem>>, vector<1x2x128xf32>
    %29 = vector.shape_cast %28 : vector<1x2x128xf32> to vector<2x128xf32>
    %30 = vector.shape_cast %26 : vector<2x128xf32> to vector<1x2x128xf32>
    tpu.vector_store %arg8[%27, %c0_17, %c0_18], %30 {strides = array<i32>} : memref<1x2x128xf32, #tpu.memory_space<vmem>>, vector<1x2x128xf32>,
    %c1_i32 = arith.constant 1 : i32
    return
  }
  func.func @transform_0(%arg0: i32) -> (i32, i32, i32) {
    %c0_i32 = arith.constant 0 : i32
    %c0_i32_0 = arith.constant 0 : i32
    %c0_i32_1 = arith.constant 0 : i32
    return %arg0, %c0_i32, %c0_i32_0 : i32, i32, i32
  }
  func.func @transform_1(%arg0: i32) -> (i32, i32) {
    %c0_i32 = arith.constant 0 : i32
    %c0_i32_0 = arith.constant 0 : i32
    %c0_i32_1 = arith.constant 0 : i32
    return %c0_i32, %c0_i32_0 : i32, i32
  }
  func.func @transform_2(%arg0: i32) -> (i32, i32) {
    %c0_i32 = arith.constant 0 : i32
    %c0_i32_0 = arith.constant 0 : i32
    %c0_i32_1 = arith.constant 0 : i32
    return %c0_i32, %c0_i32_0 : i32, i32
  }
  func.func @transform_3(%arg0: i32) -> (i32, i32) {
    %c0_i32 = arith.constant 0 : i32
    %c0_i32_0 = arith.constant 0 : i32
    %c0_i32_1 = arith.constant 0 : i32
    return %c0_i32, %c0_i32_0 : i32, i32
  }
  func.func @transform_4(%arg0: i32) -> (i32, i32) {
    %c0_i32 = arith.constant 0 : i32
    %c0_i32_0 = arith.constant 0 : i32
    %c0_i32_1 = arith.constant 0 : i32
    return %c0_i32, %c0_i32_0 : i32, i32
  }
  func.func @transform_5(%arg0: i32) -> (i32, i32) {
    %c0_i32 = arith.constant 0 : i32
    %c0_i32_0 = arith.constant 0 : i32
    %c0_i32_1 = arith.constant 0 : i32
    return %c0_i32, %c0_i32_0 : i32, i32
  }
  func.func @transform_6(%arg0: i32) -> (i32, i32) {
    %c0_i32 = arith.constant 0 : i32
    %c0_i32_0 = arith.constant 0 : i32
    %c0_i32_1 = arith.constant 0 : i32
    return %c0_i32, %c0_i32_0 : i32, i32
  }
  func.func @transform_7(%arg0: i32) -> (i32, i32, i32) {
    %c0_i32 = arith.constant 0 : i32
    %c0_i32_0 = arith.constant 0 : i32
    %c0_i32_1 = arith.constant 0 : i32
    return %arg0, %c0_i32, %c0_i32_0 : i32, i32, i32
  }
}

</mosaic_0001>

<llo_original>
// kernel: mlp_forward.1
$region0: #{mlp_forward.1}
  #allocation0 [shape = 'u32[]', space=smem, size = 0x4, offset = 0x4, fixed_abs, tag = 'smem constant byte address 0x4 - core index']
  #allocation1 [shape = 'u32[144,128]{1,0:T(1,128)}', space=vmem, size = 0x12000, scoped, tag = 'internal scratch']
  %s0 = inlined_call_operand.vmem [shape: bf16[1,6,128], index: 0, kind: input, shape index: {}]
  %s1 = inlined_call_operand.vmem [shape: bf16[32,6], index: 1, kind: input, shape index: {}]
  %s2 = inlined_call_operand.vmem [shape: f32[32,1], index: 2, kind: input, shape index: {}]
  %s3 = inlined_call_operand.vmem [shape: bf16[16,32], index: 3, kind: input, shape index: {}]
  %s4 = inlined_call_operand.vmem [shape: f32[16,1], index: 4, kind: input, shape index: {}]
  %s5 = inlined_call_operand.vmem [shape: bf16[2,16], index: 5, kind: input, shape index: {}]
  %s6 = inlined_call_operand.vmem [shape: f32[2,1], index: 6, kind: input, shape index: {}]
  %s7 = inlined_call_operand.vmem [shape: f32[1,2,128], index: 7, kind: output, shape index: {}]
  %s8 = sld [smem:[#allocation0]]
  $region38: #{mlp_forward.1} parent=0
    _
  %s10 = ssub.s32 1, %s8
  %s11 = scalar_select 0, %s10, %s8
  // Predicated region
  $region2: #{mlp_forward.1} parent=0 // pred_check
    _
  $region3: #{mlp_forward.1} parent=0 // pred_check_branch
    %13 = sbr.rel (0) target = $region5
  $region4: #{mlp_forward.1} parent=0 // pred_region
    _
  $region5: #{mlp_forward.1} parent=0 // pred_fallthru
    _
  // Predicated region
  $region6: #{mlp_forward.1} parent=0 // pred_check
    _
  $region7: #{mlp_forward.1} parent=0 // pred_check_branch
    %15 = sbr.rel (0) target = $region9
  $region8: #{mlp_forward.1} parent=0 // pred_region
    _
  $region9: #{mlp_forward.1} parent=0 // pred_fallthru
    _
  // Predicated region
  $region10: #{mlp_forward.1} parent=0 // pred_check
    _
  $region11: #{mlp_forward.1} parent=0 // pred_check_branch
    %17 = sbr.rel (0) target = $region13
  $region12: #{mlp_forward.1} parent=0 // pred_region
    _
  $region13: #{mlp_forward.1} parent=0 // pred_fallthru
    _
  // Predicated region
  $region14: #{mlp_forward.1} parent=0 // pred_check
    _
  $region15: #{mlp_forward.1} parent=0 // pred_check_branch
    %19 = sbr.rel (0) target = $region17
  $region16: #{mlp_forward.1} parent=0 // pred_region
    _
  $region17: #{mlp_forward.1} parent=0 // pred_fallthru
    _
  // Predicated region
  $region18: #{mlp_forward.1} parent=0 // pred_check
    _
  $region19: #{mlp_forward.1} parent=0 // pred_check_branch
    %21 = sbr.rel (0) target = $region21
  $region20: #{mlp_forward.1} parent=0 // pred_region
    _
  $region21: #{mlp_forward.1} parent=0 // pred_fallthru
    _
  // Predicated region
  $region22: #{mlp_forward.1} parent=0 // pred_check
    _
  $region23: #{mlp_forward.1} parent=0 // pred_check_branch
    %23 = sbr.rel (0) target = $region25
  $region24: #{mlp_forward.1} parent=0 // pred_region
    _
  $region25: #{mlp_forward.1} parent=0 // pred_fallthru
    _
  // Predicated region
  $region26: #{mlp_forward.1} parent=0 // pred_check
    _
  $region27: #{mlp_forward.1} parent=0 // pred_check_branch
    %25 = sbr.rel (0) target = $region29
  $region28: #{mlp_forward.1} parent=0 // pred_region
    _
  $region29: #{mlp_forward.1} parent=0 // pred_fallthru
    _
  %v27 = vld [vmem:[%s1] sm:$0xf]
  %v28 = vld [vmem:[%s1 + $0x4] sm:$0xf]
  %v29 = vld [vmem:[%s1 + $0x8] sm:$0xf]
  %v30 = vld [vmem:[%s1 + $0xc] sm:$0xf]
  %v31 = vld [vmem:[%s3] sm:$0xf]
  %v32 = vld [vmem:[%s3 + $0x4] sm:$0xf]
  %v33 = vld [vmem:[%s5] sm:$0x1]
  %v34 = vld [vmem:[%s2] sm:$0xff]
  %v35 = vld [vmem:[%s2 + $0x8] sm:$0xff]
  %v36 = vld [vmem:[%s2 + $0x10] sm:$0xff]
  %v37 = vld [vmem:[%s2 + $0x18] sm:$0xff]
  %39 = vset.pattern.permute.xlu0 0
  %40 = vperm.xlu0 %39, %v34
  %v41 = vpop.permute.xlu0 %40
  %44 = vset.pattern.permute.xlu0 0
  %45 = vperm.xlu0 %44, %v35
  %v46 = vpop.permute.xlu0 %45
  %49 = vset.pattern.permute.xlu0 0
  %50 = vperm.xlu0 %49, %v36
  %v51 = vpop.permute.xlu0 %50
  %54 = vset.pattern.permute.xlu0 0
  %55 = vperm.xlu0 %54, %v37
  %v56 = vpop.permute.xlu0 %55
  %v58 = vld [vmem:[%s4] sm:$0xff]
  %v59 = vld [vmem:[%s4 + $0x8] sm:$0xff]
  %61 = vset.pattern.permute.xlu0 0
  %62 = vperm.xlu0 %61, %v58
  %v63 = vpop.permute.xlu0 %62
  %66 = vset.pattern.permute.xlu0 0
  %67 = vperm.xlu0 %66, %v59
  %v68 = vpop.permute.xlu0 %67
  %v70 = vld [vmem:[%s6] sm:$0x3]
  %72 = vset.pattern.permute.xlu0 0
  %73 = vperm.xlu0 %72, %v70
  %v74 = vpop.permute.xlu0 %73
  %v76 = vld [vmem:[%s0] sm:$0x7]
  %v81 = vunpack.c.l.b16 %v27
  %v82 = vunpack.c.l.b16 %v28
  %v83 = vunpack.c.l.b16 %v29
  %v84 = vunpack.c.l.b16 %v30
  %v85 = vpack.c.b16 %v82, %v81
  %v86 = vpack.c.b16 %v84, %v83
  %vm87 = vcmask 48128
  %v89 = vsel %vm87, %v85, 0
  %v92 = vsel %vm87, %v86, 0
  %vm94 = vcmask 1042432
  %v96 = vsel %vm94, %v76, 0
  %98 = vmatprep.subr.bf16.mxu0 0
  %99 = vmatpush1.bf16.msra.mxu0 %v96
  %100 = vmatprep.subr.bf16.mxu0 0
  %101 = vmatpush1.bf16.msra.mxu0 0
  %102 = vmatprep.subr.bf16.mxu0 0
  %103 = vmatpush1.bf16.msra.mxu0 0
  %104 = vmatprep.subr.bf16.mxu0 0
  %105 = vmatpush1.bf16.msra.mxu0 0
  %106 = vmatprep.subr.bf16.mxu0 0
  %107 = vmatpush1.bf16.msra.mxu0 0
  %108 = vmatprep.subr.bf16.mxu0 0
  %109 = vmatpush1.bf16.msra.mxu0 0
  %110 = vmatprep.subr.bf16.mxu0 0
  %111 = vmatpush1.bf16.msra.mxu0 0
  %112 = vmatprep.subr.bf16.mxu0 0
  %113 = vmatpush1.bf16.msra.mxu0 0
  %114 = vmatprep.subr.bf16.mxu0 0
  %115 = vmatpush1.bf16.msra.mxu0 0
  %116 = vmatprep.subr.bf16.mxu0 0
  %117 = vmatpush1.bf16.msra.mxu0 0
  %118 = vmatprep.subr.bf16.mxu0 0
  %119 = vmatpush1.bf16.msra.mxu0 0
  %120 = vmatprep.subr.bf16.mxu0 0
  %121 = vmatpush1.bf16.msra.mxu0 0
  %122 = vmatprep.subr.bf16.mxu0 0
  %123 = vmatpush1.bf16.msra.mxu0 0
  %124 = vmatprep.subr.bf16.mxu0 0
  %125 = vmatpush1.bf16.msra.mxu0 0
  %126 = vmatprep.subr.bf16.mxu0 0
  %127 = vmatpush1.bf16.msra.mxu0 0
  %128 = vmatprep.subr.bf16.mxu0 0
  %129 = vmatpush1.bf16.msra.mxu0 0
  %130 = vmatprep.mubr.bf16.mxu0 0
  %131 = vmatmul.mubr.bf16.gmra.mrb[0].mxu0 %v89
  %v132 = vpop.f32.mrb[0].mxu0
  %v133 = vadd.f32 %v41, %v132
  %v134 = vpop.f32.mrb[0].mxu0
  %v135 = vpop.f32.mrb[0].mxu0
  %v136 = vadd.f32 %v46, %v135
  %v137 = vpop.f32.mrb[0].mxu0
  %138 = vmatprep.mubr.bf16.mxu0 0
  %139 = vmatmul.mubr.bf16.gmra.mrb[0].mxu0 %v92
  %v140 = vpop.f32.mrb[0].mxu0
  %v141 = vadd.f32 %v51, %v140
  %v142 = vpop.f32.mrb[0].mxu0
  %v143 = vpop.f32.mrb[0].mxu0
  %v144 = vadd.f32 %v56, %v143
  %v145 = vpop.f32.mrb[0].mxu0
  %146 = vdwg.mxu0
  %v147 = vmax.f32 %v133, 0.0
  %v148 = vmax.f32 %v136, 0.0
  %v149 = vmax.f32 %v141, 0.0
  %v150 = vmax.f32 %v144, 0.0
  %v151 = vpack.c.bf16 %v148, %v147
  %v152 = vpack.c.bf16 %v150, %v149
  %v155 = vunpack.c.l.b16 %v31
  %v156 = vunpack.c.l.b16 %v32
  %v157 = vpack.c.b16 %v156, %v155
  %vm158 = vcmask 261120
  %v160 = vsel %vm158, %v157, 0
  %162 = vmatprep.subr.bf16.mxu0 0
  %163 = vmatpush1.bf16.msra.mxu0 %v151
  %164 = vmatprep.subr.bf16.mxu0 0
  %165 = vmatpush1.bf16.msra.mxu0 %v152
  %166 = vmatprep.subr.bf16.mxu0 0
  %167 = vmatpush1.bf16.msra.mxu0 0
  %168 = vmatprep.subr.bf16.mxu0 0
  %169 = vmatpush1.bf16.msra.mxu0 0
  %170 = vmatprep.subr.bf16.mxu0 0
  %171 = vmatpush1.bf16.msra.mxu0 0
  %172 = vmatprep.subr.bf16.mxu0 0
  %173 = vmatpush1.bf16.msra.mxu0 0
  %174 = vmatprep.subr.bf16.mxu0 0
  %175 = vmatpush1.bf16.msra.mxu0 0
  %176 = vmatprep.subr.bf16.mxu0 0
  %177 = vmatpush1.bf16.msra.mxu0 0
  %178 = vmatprep.subr.bf16.mxu0 0
  %179 = vmatpush1.bf16.msra.mxu0 0
  %180 = vmatprep.subr.bf16.mxu0 0
  %181 = vmatpush1.bf16.msra.mxu0 0
  %182 = vmatprep.subr.bf16.mxu0 0
  %183 = vmatpush1.bf16.msra.mxu0 0
  %184 = vmatprep.subr.bf16.mxu0 0
  %185 = vmatpush1.bf16.msra.mxu0 0
  %186 = vmatprep.subr.bf16.mxu0 0
  %187 = vmatpush1.bf16.msra.mxu0 0
  %188 = vmatprep.subr.bf16.mxu0 0
  %189 = vmatpush1.bf16.msra.mxu0 0
  %190 = vmatprep.subr.bf16.mxu0 0
  %191 = vmatpush1.bf16.msra.mxu0 0
  %192 = vmatprep.subr.bf16.mxu0 0
  %193 = vmatpush1.bf16.msra.mxu0 0
  %194 = vmatprep.mubr.bf16.mxu0 0
  %195 = vmatmul.mubr.bf16.gmra.mrb[0].mxu0 %v160
  %v196 = vpop.f32.mrb[0].mxu0
  %v197 = vadd.f32 %v63, %v196
  %v198 = vpop.f32.mrb[0].mxu0
  %v199 = vpop.f32.mrb[0].mxu0
  %v200 = vadd.f32 %v68, %v199
  %v201 = vpop.f32.mrb[0].mxu0
  %202 = vdwg.mxu0
  %v203 = vmax.f32 %v197, 0.0
  %v204 = vmax.f32 %v200, 0.0
  %v205 = vpack.c.bf16 %v204, %v203
  %vm206 = vcmask 130048
  %v208 = vsel %vm206, %v33, 0
  %210 = vmatprep.subr.bf16.mxu0 0
  %211 = vmatpush1.bf16.msra.mxu0 %v205
  %212 = vmatprep.subr.bf16.mxu0 0
  %213 = vmatpush1.bf16.msra.mxu0 0
  %214 = vmatprep.subr.bf16.mxu0 0
  %215 = vmatpush1.bf16.msra.mxu0 0
  %216 = vmatprep.subr.bf16.mxu0 0
  %217 = vmatpush1.bf16.msra.mxu0 0
  %218 = vmatprep.subr.bf16.mxu0 0
  %219 = vmatpush1.bf16.msra.mxu0 0
  %220 = vmatprep.subr.bf16.mxu0 0
  %221 = vmatpush1.bf16.msra.mxu0 0
  %222 = vmatprep.subr.bf16.mxu0 0
  %223 = vmatpush1.bf16.msra.mxu0 0
  %224 = vmatprep.subr.bf16.mxu0 0
  %225 = vmatpush1.bf16.msra.mxu0 0
  %226 = vmatprep.subr.bf16.mxu0 0
  %227 = vmatpush1.bf16.msra.mxu0 0
  %228 = vmatprep.subr.bf16.mxu0 0
  %229 = vmatpush1.bf16.msra.mxu0 0
  %230 = vmatprep.subr.bf16.mxu0 0
  %231 = vmatpush1.bf16.msra.mxu0 0
  %232 = vmatprep.subr.bf16.mxu0 0
  %233 = vmatpush1.bf16.msra.mxu0 0
  %234 = vmatprep.subr.bf16.mxu0 0
  %235 = vmatpush1.bf16.msra.mxu0 0
  %236 = vmatprep.subr.bf16.mxu0 0
  %237 = vmatpush1.bf16.msra.mxu0 0
  %238 = vmatprep.subr.bf16.mxu0 0
  %239 = vmatpush1.bf16.msra.mxu0 0
  %240 = vmatprep.subr.bf16.mxu0 0
  %241 = vmatpush1.bf16.msra.mxu0 0
  %242 = vmatprep.mubr.bf16.mxu0 0
  %243 = vmatmul.mubr.bf16.gmra.mrb[0].mxu0 %v208
  %v244 = vpop.f32.mrb[0].mxu0
  %v245 = vadd.f32 %v74, %v244
  %v246 = vpop.f32.mrb[0].mxu0
  %v247 = vpop.f32.mrb[0].mxu0
  %v248 = vpop.f32.mrb[0].mxu0
  %249 = vdwg.mxu0
  %250 = vst [vmem:[%s7] sm:$0x3] %v245
  // Predicated region
  $region30: #{mlp_forward.1} parent=0 // pred_check
    _
  $region31: #{mlp_forward.1} parent=0 // pred_check_branch
    %252 = sbr.rel (0) target = $region33
  $region32: #{mlp_forward.1} parent=0 // pred_region
    _
  $region33: #{mlp_forward.1} parent=0 // pred_fallthru
    _
  // Predicated region
  $region34: #{mlp_forward.1} parent=0 // pred_check
    _
  $region35: #{mlp_forward.1} parent=0 // pred_check_branch
    %254 = sbr.rel (0) target = $region37
  $region36: #{mlp_forward.1} parent=0 // pred_region
    _
  $region37: #{mlp_forward.1} parent=0 // pred_fallthru
    _

</llo_original>
